<compile_context>
chip_gen: v5e
topology: v5e:2x2
jax: 0.10.0
libtpu: 0.0.40
codegen_flags: <defaults>
</compile_context>

<pallas_src>
import functools

import jax
import jax.numpy as jnp
from jax.experimental import pallas as pl
from jax.experimental.pallas import tpu as pltpu


def _round_up(x, m):
    return ((x + m - 1) // m) * m


def _v_critic_kernel(x_ref, w1_ref, b1_ref, w2_ref, b2_ref, w3_ref, b3_ref, o_ref):
    """One batch tile, batch on the lane axis throughout.

    x_ref : (S, TILE_B)     state columns (f32 or bf16), lane-dense
    w1_ref: (W, S)          C1.weight, PyTorch layout
    b1_ref: (W, 1)          C1.bias as a column (dtype == elementwise dtype)
    w2_ref: (W, W)          C2.weight
    b2_ref: (W, 1)          C2.bias as a column (dtype == elementwise dtype)
    w3_ref: (W, 1)          C3.weight as a column (f32)
    b3_ref: (1, 1)          C3.bias (f32)
    o_ref : (1, 1, TILE_B)  per-row values, batch on lanes -> unmasked stores
    """
    act_dt = b1_ref.dtype  # elementwise (bias-add + tanh) dtype
    x = x_ref[...]

    # Layer 1: (W, S) @ (S, TILE_B) -> (W, TILE_B), f32 MXU accumulation.
    h = jnp.dot(w1_ref[...], x, preferred_element_type=jnp.float32)
    h = jnp.tanh(h.astype(act_dt) + b1_ref[...])

    # Layer 2: (W, W) @ (W, TILE_B) -> (W, TILE_B), f32 MXU accumulation.
    h = jnp.dot(w2_ref[...], h.astype(w2_ref.dtype), preferred_element_type=jnp.float32)
    h = jnp.tanh(h.astype(act_dt) + b2_ref[...])

    # Layer 3 (W -> 1): VPU multiply + cross-sublane (XLU) reduction instead of an
    # MXU matmul with a 1-wide dimension. Result is already lane-dense (1, TILE_B).
    v = jnp.sum(h.astype(jnp.float32) * w3_ref[...], axis=0, keepdims=True) + b3_ref[...]
    o_ref[...] = v.reshape(o_ref.shape).astype(o_ref.dtype)


def v_critic_forward(state, params, *, tile_b=8192, input_dtype=jnp.float32,
                     elementwise_dtype=None, state_is_transposed=False):
    """V_Critic forward.

    state : [B, state_dim] (or [state_dim, B] if state_is_transposed=True).
    params: PyTorch-layout dict (W: [out, in], b: [out]).
    tile_b: batch tile; sweep 4096-8192 (per-grid-step overhead ~0.35 us, so
            small tiles are overhead-dominated). Automatically capped so that
            num_tiles >= 2 when B > 128 (megacore sharding on v7x).
    input_dtype / elementwise_dtype:
        v6e/v7x: input_dtype=bfloat16 (default elementwise follows -> bf16 tanh).
        v5e    : input_dtype=bfloat16, elementwise_dtype=float32 (no bf16 EUP).
        f32/f32 gives exact parity with the PyTorch module.
    Returns [B, 1] (PyTorch parity). If the values feed another Pallas kernel,
    prefer consuming the lane-dense internal slab directly instead.
    """
    if state_is_transposed:
        state_dim, B = state.shape
    else:
        B, state_dim = state.shape
    net_width = params["W1"].shape[0]

    in_dt = jnp.dtype(input_dtype)
    act_dt = jnp.dtype(elementwise_dtype) if elementwise_dtype is not None else in_dt

    # Batch tile: multiple of 128 (lane-dense), large to amortize step overhead,
    # but >= 2 tiles when the batch allows it (v7x megacore).
    tile_b = max(128, _round_up(int(tile_b), 128))
    if B > 128:
        tile_b = min(tile_b, max(128, _round_up(-(-B // 2), 128)))
    tile_b = min(tile_b, _round_up(B, 128))
    b_pad = _round_up(B, tile_b)
    num_tiles = b_pad // tile_b

    # Present the state batch-on-lanes. Ideally the producer emits (S, B)
    # directly (state_is_transposed=True) so this transpose disappears.
    x = state.astype(in_dt) if state_is_transposed else state.astype(in_dt).T  # (S, B)
    if b_pad != B:
        x = jnp.pad(x, ((0, 0), (0, b_pad - B)))  # zero tail cols; sliced away below

    # PyTorch-native weight layouts go straight in; only tiny vectors are reshaped.
    w1 = params["W1"].astype(in_dt)                             # (W, S)
    w2 = params["W2"].astype(in_dt)                             # (W, W)
    b1 = params["b1"].reshape(net_width, 1).astype(act_dt)      # (W, 1)
    b2 = params["b2"].reshape(net_width, 1).astype(act_dt)      # (W, 1)
    w3 = params["W3"].reshape(net_width, 1).astype(jnp.float32) # (W, 1)
    b3 = params["b3"].reshape(1, 1).astype(jnp.float32)         # (1, 1)

    itemsize = in_dt.itemsize
    weight_bytes = ((w1.size + w2.size) * itemsize
                    + (b1.size + b2.size) * act_dt.itemsize
                    + (w3.size + b3.size) * 4)
    cost = pl.CostEstimate(
        flops=2 * b_pad * (state_dim * net_width + net_width * net_width + net_width),
        transcendentals=2 * b_pad * net_width,
        bytes_accessed=int(b_pad * state_dim * itemsize + b_pad * 4 + weight_bytes),
    )

    const2d = lambda shape: pl.BlockSpec(shape, lambda i: (0, 0))  # VMEM-resident operand

    out = pl.pallas_call(
        _v_critic_kernel,
        out_shape=jax.ShapeDtypeStruct((num_tiles, 1, tile_b), jnp.float32),
        grid_spec=pltpu.PrefetchScalarGridSpec(
            num_scalar_prefetch=0,
            grid=(num_tiles,),
            in_specs=[
                pl.BlockSpec((state_dim, tile_b), lambda i: (0, i)),  # streamed state, lane-dense
                const2d((net_width, state_dim)),                      # W1
                const2d((net_width, 1)),                              # b1
                const2d((net_width, net_width)),                      # W2
                const2d((net_width, 1)),                              # b2
                const2d((net_width, 1)),                              # W3 (as column)
                const2d((1, 1)),                                      # b3
            ],
            out_specs=pl.BlockSpec((1, 1, tile_b), lambda i: (i, 0, 0)),
        ),
        compiler_params=pltpu.CompilerParams(
            dimension_semantics=("parallel",),   # shard batch tiles across TCs (v7x)
            vmem_limit_bytes=32 * 1024 * 1024,   # safe on v7x's 64 MiB physical VMEM
        ),
        cost_estimate=cost,
    )(x, w1, b1, w2, b2, w3, b3)

    # NOTE: the raw (num_tiles, 1, tile_b) slab contains garbage (tanh(b1) chains)
    # in the zero-padded tail; always slice to B before consuming.
    return out.reshape(-1)[:B].reshape(B, 1)


def init_params(key, state_dim, net_width):
    """Deterministic init matching nn.Linear shapes (W: [out, in], b: [out])."""
    k1, k2, k3, k4, k5, k6 = jax.random.split(key, 6)

    def uinit(k, shape, fan_in):
        bound = 1.0 / jnp.sqrt(fan_in)
        return jax.random.uniform(k, shape, jnp.float32, -bound, bound)

    return {
        "W1": uinit(k1, (net_width, state_dim), state_dim),
        "b1": uinit(k2, (net_width,), state_dim),
        "W2": uinit(k3, (net_width, net_width), net_width),
        "b2": uinit(k4, (net_width,), net_width),
        "W3": uinit(k5, (1, net_width), net_width),
        "b3": uinit(k6, (1,), net_width),
    }


def v_critic_reference(state, p, dtype=jnp.float32):
    dt = jnp.dtype(dtype)
    x = state.astype(dt).astype(jnp.float32)
    w1 = p["W1"].astype(dt).astype(jnp.float32)
    w2 = p["W2"].astype(dt).astype(jnp.float32)
    v = jnp.tanh(x @ w1.T + p["b1"])
    v = jnp.tanh(v @ w2.T + p["b2"])
    return v @ p["W3"].T + p["b3"]


if __name__ == "__main__":
    key = jax.random.PRNGKey(0)
    k_params, k_state, k_state2 = jax.random.split(key, 3)

    state_dim, net_width = 16, 32
    params = init_params(k_params, state_dim, net_width)

    # --- Small batch (single tile), f32 path: exact parity with the PyTorch module.
    B = 8
    state = jax.random.normal(k_state, (B, state_dim), jnp.float32)
    ref = v_critic_reference(state, params)
    fwd = jax.jit(v_critic_forward)
    out = jax.block_until_ready(fwd(state, params))
    assert out.shape == (B, 1), out.shape
    assert jnp.allclose(out, ref, atol=1e-5, rtol=1e-5), (out, ref)

    # --- Multi-tile path (B > 128 -> 2 tiles, exercises megacore split + tail slicing).
    B2 = 300
    state2 = jax.random.normal(k_state2, (B2, state_dim), jnp.float32)
    ref2 = v_critic_reference(state2, params)
    out2 = jax.block_until_ready(fwd(state2, params))
    assert out2.shape == (B2, 1), out2.shape
    assert jnp.allclose(out2, ref2, atol=1e-5, rtol=1e-5)

    # --- bf16 streaming + bf16 elementwise (recommended on v6e/v7x).
    fwd_bf16 = jax.jit(functools.partial(v_critic_forward, input_dtype=jnp.bfloat16))
    out_bf16 = jax.block_until_ready(fwd_bf16(state, params))
    ref_bf16 = v_critic_reference(state, params, jnp.bfloat16)
    assert out_bf16.shape == (B, 1), out_bf16.shape
    assert jnp.allclose(out_bf16, ref_bf16, atol=3e-2, rtol=3e-2), (out_bf16, ref_bf16)

    # --- bf16 streaming + f32 elementwise (recommended on v5e: no bf16 EUP there).
    fwd_hybrid = jax.jit(functools.partial(
        v_critic_forward, input_dtype=jnp.bfloat16, elementwise_dtype=jnp.float32))
    out_hyb = jax.block_until_ready(fwd_hybrid(state, params))
    assert out_hyb.shape == (B, 1), out_hyb.shape
    assert jnp.allclose(out_hyb, ref_bf16, atol=3e-2, rtol=3e-2), (out_hyb, ref_bf16)

    print("KERNEL_OK")
</pallas_src>

<mosaic_0001>
module attributes {stable_mosaic.version = 11 : i64} {
  func.func @_v_critic_kernel(%arg0: i32, %arg1: memref<16x128xf32, #tpu.memory_space<vmem>>, %arg2: memref<32x16xf32, #tpu.memory_space<vmem>>, %arg3: memref<32x1xf32, #tpu.memory_space<vmem>>, %arg4: memref<32x32xf32, #tpu.memory_space<vmem>>, %arg5: memref<32x1xf32, #tpu.memory_space<vmem>>, %arg6: memref<32x1xf32, #tpu.memory_space<vmem>>, %arg7: memref<1x1xf32, #tpu.memory_space<vmem>>, %arg8: memref<1x1x128xf32, #tpu.memory_space<vmem>>) attributes {dimension_semantics = [#tpu.dimension_semantics<parallel>], iteration_bounds = array<i64: 1>, scalar_prefetch = 0 : i64, scratch_operands = 0 : i64, tpu.core_type = #tpu.core_type<tc>, window_params = [{transform_indices = @transform_0, window_bounds = array<i64: 16, 128>}, {pipeline_mode = #tpu.pipeline_mode<synchronous>, transform_indices = @transform_1, window_bounds = array<i64: 32, 16>}, {pipeline_mode = #tpu.pipeline_mode<synchronous>, transform_indices = @transform_2, window_bounds = array<i64: 32, 1>}, {pipeline_mode = #tpu.pipeline_mode<synchronous>, transform_indices = @transform_3, window_bounds = array<i64: 32, 32>}, {pipeline_mode = #tpu.pipeline_mode<synchronous>, transform_indices = @transform_4, window_bounds = array<i64: 32, 1>}, {pipeline_mode = #tpu.pipeline_mode<synchronous>, transform_indices = @transform_5, window_bounds = array<i64: 32, 1>}, {pipeline_mode = #tpu.pipeline_mode<synchronous>, transform_indices = @transform_6, window_bounds = array<i64: 1, 1>}, {transform_indices = @transform_7, window_bounds = array<i64: 1, 1, 128>}]} {
    %c0 = arith.constant 0 : index
    %c0_0 = arith.constant 0 : index
    %0 = vector.load %arg1[%c0, %c0_0] : memref<16x128xf32, #tpu.memory_space<vmem>>, vector<16x128xf32>
    %c0_1 = arith.constant 0 : index
    %c0_2 = arith.constant 0 : index
    %1 = vector.load %arg2[%c0_1, %c0_2] : memref<32x16xf32, #tpu.memory_space<vmem>>, vector<32x16xf32>
    %cst = arith.constant dense<0.000000e+00> : vector<32x128xf32>
    %2 = tpu.matmul %1, %0, %cst {dimension_numbers = #tpu.dot_dimension_numbers<[1], [0], [0], [1], [0, 0, 1, 1], [], []>} : vector<32x16xf32>, vector<16x128xf32>, vector<32x128xf32> -> vector<32x128xf32>
    %c0_3 = arith.constant 0 : index
    %c0_4 = arith.constant 0 : index
    %3 = vector.load %arg3[%c0_3, %c0_4] : memref<32x1xf32, #tpu.memory_space<vmem>>, vector<32x1xf32>
    %4 = vector.broadcast %3 : vector<32x1xf32> to vector<32x128xf32>
    %5 = arith.addf %2, %4 : vector<32x128xf32>
    %6 = math.tanh %5 : vector<32x128xf32>
    %c0_5 = arith.constant 0 : index
    %c0_6 = arith.constant 0 : index
    %7 = vector.load %arg4[%c0_5, %c0_6] : memref<32x32xf32, #tpu.memory_space<vmem>>, vector<32x32xf32>
    %cst_7 = arith.constant dense<0.000000e+00> : vector<32x128xf32>
    %8 = tpu.matmul %7, %6, %cst_7 {dimension_numbers = #tpu.dot_dimension_numbers<[1], [0], [0], [1], [0, 0, 1, 1], [], []>} : vector<32x32xf32>, vector<32x128xf32>, vector<32x128xf32> -> vector<32x128xf32>
    %c0_8 = arith.constant 0 : index
    %c0_9 = arith.constant 0 : index
    %9 = vector.load %arg5[%c0_8, %c0_9] : memref<32x1xf32, #tpu.memory_space<vmem>>, vector<32x1xf32>
    %10 = vector.broadcast %9 : vector<32x1xf32> to vector<32x128xf32>
    %11 = arith.addf %8, %10 : vector<32x128xf32>
    %12 = math.tanh %11 : vector<32x128xf32>
    %c0_10 = arith.constant 0 : index
    %c0_11 = arith.constant 0 : index
    %13 = vector.load %arg6[%c0_10, %c0_11] : memref<32x1xf32, #tpu.memory_space<vmem>>, vector<32x1xf32>
    %14 = vector.broadcast %13 : vector<32x1xf32> to vector<32x128xf32>
    %15 = arith.mulf %12, %14 : vector<32x128xf32>
    %cst_12 = arith.constant dense<0.000000e+00> : vector<128xf32>
    %16 = vector.multi_reduction <add>, %15, %cst_12 [0] : vector<32x128xf32> to vector<128xf32>
    %17 = vector.shape_cast %16 : vector<128xf32> to vector<1x128xf32>
    %c0_13 = arith.constant 0 : index
    %c0_14 = arith.constant 0 : index
    %18 = vector.load %arg7[%c0_13, %c0_14] : memref<1x1xf32, #tpu.memory_space<vmem>>, vector<1x1xf32>
    %19 = vector.broadcast %18 : vector<1x1xf32> to vector<1x128xf32>
    %20 = arith.addf %17, %19 : vector<1x128xf32>
    %21 = vector.shape_cast %20 : vector<1x128xf32> to vector<1x1x128xf32>
    %c0_15 = arith.constant 0 : index
    %c0_16 = arith.constant 0 : index
    %c0_17 = arith.constant 0 : index
    %22 = vector.load %arg8[%c0_15, %c0_16, %c0_17] : memref<1x1x128xf32, #tpu.memory_space<vmem>>, vector<1x1x128xf32>
    tpu.vector_store %arg8[%c0_15, %c0_16, %c0_17], %21 {strides = array<i32>} : memref<1x1x128xf32, #tpu.memory_space<vmem>>, vector<1x1x128xf32>,
    return
  }
  func.func @transform_0(%arg0: i32) -> (i32, i32) {
    %c0_i32 = arith.constant 0 : i32
    %c0_i32_0 = arith.constant 0 : i32
    return %c0_i32, %arg0 : i32, i32
  }
  func.func @transform_1(%arg0: i32) -> (i32, i32) {
    %c0_i32 = arith.constant 0 : i32
    %c0_i32_0 = arith.constant 0 : i32
    %c0_i32_1 = arith.constant 0 : i32
    return %c0_i32, %c0_i32_0 : i32, i32
  }
  func.func @transform_2(%arg0: i32) -> (i32, i32) {
    %c0_i32 = arith.constant 0 : i32
    %c0_i32_0 = arith.constant 0 : i32
    %c0_i32_1 = arith.constant 0 : i32
    return %c0_i32, %c0_i32_0 : i32, i32
  }
  func.func @transform_3(%arg0: i32) -> (i32, i32) {
    %c0_i32 = arith.constant 0 : i32
    %c0_i32_0 = arith.constant 0 : i32
    %c0_i32_1 = arith.constant 0 : i32
    return %c0_i32, %c0_i32_0 : i32, i32
  }
  func.func @transform_4(%arg0: i32) -> (i32, i32) {
    %c0_i32 = arith.constant 0 : i32
    %c0_i32_0 = arith.constant 0 : i32
    %c0_i32_1 = arith.constant 0 : i32
    return %c0_i32, %c0_i32_0 : i32, i32
  }
  func.func @transform_5(%arg0: i32) -> (i32, i32) {
    %c0_i32 = arith.constant 0 : i32
    %c0_i32_0 = arith.constant 0 : i32
    %c0_i32_1 = arith.constant 0 : i32
    return %c0_i32, %c0_i32_0 : i32, i32
  }
  func.func @transform_6(%arg0: i32) -> (i32, i32) {
    %c0_i32 = arith.constant 0 : i32
    %c0_i32_0 = arith.constant 0 : i32
    %c0_i32_1 = arith.constant 0 : i32
    return %c0_i32, %c0_i32_0 : i32, i32
  }
  func.func @transform_7(%arg0: i32) -> (i32, i32, i32) {
    %c0_i32 = arith.constant 0 : i32
    %c0_i32_0 = arith.constant 0 : i32
    %c0_i32_1 = arith.constant 0 : i32
    return %arg0, %c0_i32, %c0_i32_0 : i32, i32, i32
  }
}

</mosaic_0001>

<llo_original>
// kernel: v_critic_forward.1
$region0: #{v_critic_forward.1}
  #allocation0 [shape = 'u32[]', space=smem, size = 0x4, offset = 0x4, fixed_abs, tag = 'smem constant byte address 0x4 - core index']
  #allocation1 [shape = 'u32[72,128]{1,0:T(1,128)}', space=vmem, size = 0x9000, scoped, tag = 'internal scratch']
  #allocation2 [shape = 'f32[1,1]{1,0:T(1,128)S(1)}', space=vmem, size = 0x200, scoped, tag = 'scoped memory for v_critic_forward.1']
  %s0 = inlined_call_operand.vmem [shape: f32[16,128], index: 0, kind: input, shape index: {}]
  %s1 = inlined_call_operand.vmem [shape: f32[32,16], index: 1, kind: input, shape index: {}]
  %s2 = inlined_call_operand.vmem [shape: f32[32,1], index: 2, kind: input, shape index: {}]
  %s3 = inlined_call_operand.vmem [shape: f32[32,32], index: 3, kind: input, shape index: {}]
  %s4 = inlined_call_operand.vmem [shape: f32[32,1], index: 4, kind: input, shape index: {}]
  %s5 = inlined_call_operand.vmem [shape: f32[32,1], index: 5, kind: input, shape index: {}]
  %s6 = inlined_call_operand.<no memory space> [shape: f32[1,1], index: 6, kind: input, shape index: {}]
  %s7 = inlined_call_operand.vmem [shape: f32[1,1,128], index: 7, kind: output, shape index: {}]
  %s8 = sld [smem:[#allocation0]]
  $region38: #{v_critic_forward.1} parent=0
    _
  %s10 = ssub.s32 1, %s8
  %s11 = scalar_select 0, %s10, %s8
  %v12 = vstv %s6
  %13 = vst [vmem:[#allocation2] sm:$0x1] %v12
  // Predicated region
  $region2: #{v_critic_forward.1} parent=0 // pred_check
    _
  $region3: #{v_critic_forward.1} parent=0 // pred_check_branch
    %15 = sbr.rel (0) target = $region5
  $region4: #{v_critic_forward.1} parent=0 // pred_region
    _
  $region5: #{v_critic_forward.1} parent=0 // pred_fallthru
    _
  // Predicated region
  $region6: #{v_critic_forward.1} parent=0 // pred_check
    _
  $region7: #{v_critic_forward.1} parent=0 // pred_check_branch
    %17 = sbr.rel (0) target = $region9
  $region8: #{v_critic_forward.1} parent=0 // pred_region
    _
  $region9: #{v_critic_forward.1} parent=0 // pred_fallthru
    _
  // Predicated region
  $region10: #{v_critic_forward.1} parent=0 // pred_check
    _
  $region11: #{v_critic_forward.1} parent=0 // pred_check_branch
    %19 = sbr.rel (0) target = $region13
  $region12: #{v_critic_forward.1} parent=0 // pred_region
    _
  $region13: #{v_critic_forward.1} parent=0 // pred_fallthru
    _
  // Predicated region
  $region14: #{v_critic_forward.1} parent=0 // pred_check
    _
  $region15: #{v_critic_forward.1} parent=0 // pred_check_branch
    %21 = sbr.rel (0) target = $region17
  $region16: #{v_critic_forward.1} parent=0 // pred_region
    _
  $region17: #{v_critic_forward.1} parent=0 // pred_fallthru
    _
  // Predicated region
  $region18: #{v_critic_forward.1} parent=0 // pred_check
    _
  $region19: #{v_critic_forward.1} parent=0 // pred_check_branch
    %23 = sbr.rel (0) target = $region21
  $region20: #{v_critic_forward.1} parent=0 // pred_region
    _
  $region21: #{v_critic_forward.1} parent=0 // pred_fallthru
    _
  // Predicated region
  $region22: #{v_critic_forward.1} parent=0 // pred_check
    _
  $region23: #{v_critic_forward.1} parent=0 // pred_check_branch
    %25 = sbr.rel (0) target = $region25
  $region24: #{v_critic_forward.1} parent=0 // pred_region
    _
  $region25: #{v_critic_forward.1} parent=0 // pred_fallthru
    _
  // Predicated region
  $region26: #{v_critic_forward.1} parent=0 // pred_check
    _
  $region27: #{v_critic_forward.1} parent=0 // pred_check_branch
    %27 = sbr.rel (0) target = $region29
  $region28: #{v_critic_forward.1} parent=0 // pred_region
    _
  $region29: #{v_critic_forward.1} parent=0 // pred_fallthru
    _
  %v28 = vld [vmem:[%s0] sm:$0xff]
  %v29 = vld [vmem:[%s0 + $0x8] sm:$0xff]
  %v30 = vld [vmem:[%s1] sm:$0xff]
  %v31 = vld [vmem:[%s1 + $0x8] sm:$0xff]
  %v32 = vld [vmem:[%s1 + $0x10] sm:$0xff]
  %v33 = vld [vmem:[%s1 + $0x18] sm:$0xff]
  %v34 = vld [vmem:[%s2] sm:$0xff]
  %v35 = vld [vmem:[%s2 + $0x8] sm:$0xff]
  %v36 = vld [vmem:[%s2 + $0x10] sm:$0xff]
  %v37 = vld [vmem:[%s2 + $0x18] sm:$0xff]
  %39 = vset.pattern.permute.xlu0 0
  %40 = vperm.xlu0 %39, %v34
  %v41 = vpop.permute.xlu0 %40
  %44 = vset.pattern.permute.xlu0 0
  %45 = vperm.xlu0 %44, %v35
  %v46 = vpop.permute.xlu0 %45
  %49 = vset.pattern.permute.xlu0 0
  %50 = vperm.xlu0 %49, %v36
  %v51 = vpop.permute.xlu0 %50
  %54 = vset.pattern.permute.xlu0 0
  %55 = vperm.xlu0 %54, %v37
  %v56 = vpop.permute.xlu0 %55
  %vm58 = vcmask 130048
  %v60 = vsel %vm58, %v30, 0
  %v63 = vsel %vm58, %v31, 0
  %v66 = vsel %vm58, %v32, 0
  %v69 = vsel %vm58, %v33, 0
  %71 = vmatpush.msra.mxu0 0.0
  %72 = vmatpush.msra.mxu0 0.0
  %73 = vmatpush.msra.mxu0 0.0
  %74 = vmatpush.msra.mxu0 0.0
  %75 = vmatpush.msra.mxu0 0.0
  %76 = vmatpush.msra.mxu0 0.0
  %77 = vmatpush.msra.mxu0 0.0
  %78 = vmatpush.msra.mxu0 0.0
  %79 = vmatpush.msra.mxu0 0.0
  %80 = vmatpush.msra.mxu0 0.0
  %81 = vmatpush.msra.mxu0 0.0
  %82 = vmatpush.msra.mxu0 0.0
  %83 = vmatpush.msra.mxu0 0.0
  %84 = vmatpush.msra.mxu0 0.0
  %85 = vmatpush.msra.mxu0 %v29
  %86 = vmatpush.msra.mxu0 %v28
  %87 = vmatmul.f32.gmra.mxu0 %v60
  %v88 = vpop.f32.mrf.mxu0
  %v89 = vadd.f32 %v41, %v88
  %90 = vmatmul.f32.gmra.mxu0 %v63
  %v91 = vpop.f32.mrf.mxu0
  %v92 = vadd.f32 %v46, %v91
  %93 = vmatmul.f32.gmra.mxu0 %v66
  %v94 = vpop.f32.mrf.mxu0
  %v95 = vadd.f32 %v51, %v94
  %96 = vmatmul.f32.gmra.mxu0 %v69
  %v97 = vpop.f32.mrf.mxu0
  %v98 = vadd.f32 %v56, %v97
  %99 = vdwg.mxu0
  %v100 = vtanh.pop %v89
  %v101 = vtanh.pop %v92
  %v102 = vtanh.pop %v95
  %v103 = vtanh.pop %v98
  %v104 = vld [vmem:[%s3] sm:$0xff]
  %v105 = vld [vmem:[%s3 + $0x8] sm:$0xff]
  %v106 = vld [vmem:[%s3 + $0x10] sm:$0xff]
  %v107 = vld [vmem:[%s3 + $0x18] sm:$0xff]
  %v108 = vld [vmem:[%s4] sm:$0xff]
  %v109 = vld [vmem:[%s4 + $0x8] sm:$0xff]
  %v110 = vld [vmem:[%s4 + $0x10] sm:$0xff]
  %v111 = vld [vmem:[%s4 + $0x18] sm:$0xff]
  %113 = vset.pattern.permute.xlu0 0
  %114 = vperm.xlu0 %113, %v108
  %v115 = vpop.permute.xlu0 %114
  %118 = vset.pattern.permute.xlu0 0
  %119 = vperm.xlu0 %118, %v109
  %v120 = vpop.permute.xlu0 %119
  %123 = vset.pattern.permute.xlu0 0
  %124 = vperm.xlu0 %123, %v110
  %v125 = vpop.permute.xlu0 %124
  %128 = vset.pattern.permute.xlu0 0
  %129 = vperm.xlu0 %128, %v111
  %v130 = vpop.permute.xlu0 %129
  %vm132 = vcmask 261120
  %v134 = vsel %vm132, %v104, 0
  %v137 = vsel %vm132, %v105, 0
  %v140 = vsel %vm132, %v106, 0
  %v143 = vsel %vm132, %v107, 0
  %145 = vmatpush.msra.mxu0 0.0
  %146 = vmatpush.msra.mxu0 0.0
  %147 = vmatpush.msra.mxu0 0.0
  %148 = vmatpush.msra.mxu0 0.0
  %149 = vmatpush.msra.mxu0 0.0
  %150 = vmatpush.msra.mxu0 0.0
  %151 = vmatpush.msra.mxu0 0.0
  %152 = vmatpush.msra.mxu0 0.0
  %153 = vmatpush.msra.mxu0 0.0
  %154 = vmatpush.msra.mxu0 0.0
  %155 = vmatpush.msra.mxu0 0.0
  %156 = vmatpush.msra.mxu0 0.0
  %157 = vmatpush.msra.mxu0 %v103
  %158 = vmatpush.msra.mxu0 %v102
  %159 = vmatpush.msra.mxu0 %v101
  %160 = vmatpush.msra.mxu0 %v100
  %161 = vmatmul.f32.gmra.mxu0 %v134
  %v162 = vpop.f32.mrf.mxu0
  %v163 = vadd.f32 %v115, %v162
  %164 = vmatmul.f32.gmra.mxu0 %v137
  %v165 = vpop.f32.mrf.mxu0
  %v166 = vadd.f32 %v120, %v165
  %167 = vmatmul.f32.gmra.mxu0 %v140
  %v168 = vpop.f32.mrf.mxu0
  %v169 = vadd.f32 %v125, %v168
  %170 = vmatmul.f32.gmra.mxu0 %v143
  %v171 = vpop.f32.mrf.mxu0
  %v172 = vadd.f32 %v130, %v171
  %173 = vdwg.mxu0
  %v174 = vtanh.pop %v163
  %v175 = vtanh.pop %v166
  %v176 = vtanh.pop %v169
  %v177 = vtanh.pop %v172
  %v178 = vld [vmem:[%s5] sm:$0xff]
  %v179 = vld [vmem:[%s5 + $0x8] sm:$0xff]
  %v180 = vld [vmem:[%s5 + $0x10] sm:$0xff]
  %v181 = vld [vmem:[%s5 + $0x18] sm:$0xff]
  %183 = vset.pattern.permute.xlu0 0
  %184 = vperm.xlu0 %183, %v178
  %v185 = vpop.permute.xlu0 %184
  %188 = vset.pattern.permute.xlu0 0
  %189 = vperm.xlu0 %188, %v179
  %v190 = vpop.permute.xlu0 %189
  %193 = vset.pattern.permute.xlu0 0
  %194 = vperm.xlu0 %193, %v180
  %v195 = vpop.permute.xlu0 %194
  %198 = vset.pattern.permute.xlu0 0
  %199 = vperm.xlu0 %198, %v181
  %v200 = vpop.permute.xlu0 %199
  %v202 = vmul.f32 %v174, %v185
  %v203 = vmul.f32 %v175, %v190
  %v204 = vmul.f32 %v176, %v195
  %v205 = vmul.f32 %v177, %v200
  %v206 = vadd.f32 %v202, %v203
  %v207 = vadd.f32 %v206, %v204
  %v208 = vadd.f32 %v207, %v205
  %v209 = vrot.slane %v208, 4
  %v210 = vadd.f32 %v208, %v209
  %v211 = vrot.slane %v210, 2
  %v212 = vadd.f32 %v210, %v211
  %v213 = vrot.slane %v212, 1
  %v214 = vadd.f32 %v212, %v213
  %v215 = vld [vmem:[#allocation2] sm:$0x1]
  %217 = vset.pattern.permute.xlu0 0
  %218 = vperm.xlu0 %217, %v215
  %v219 = vpop.permute.xlu0 %218
  %v221 = vperm.slane %v219, 0
  %v222 = vadd.f32 %v214, %v221
  %223 = vst [vmem:[%s7] sm:$0x1] %v222
  // Predicated region
  $region30: #{v_critic_forward.1} parent=0 // pred_check
    _
  $region31: #{v_critic_forward.1} parent=0 // pred_check_branch
    %225 = sbr.rel (0) target = $region33
  $region32: #{v_critic_forward.1} parent=0 // pred_region
    _
  $region33: #{v_critic_forward.1} parent=0 // pred_fallthru
    _
  // Predicated region
  $region34: #{v_critic_forward.1} parent=0 // pred_check
    _
  $region35: #{v_critic_forward.1} parent=0 // pred_check_branch
    %227 = sbr.rel (0) target = $region37
  $region36: #{v_critic_forward.1} parent=0 // pred_region
    _
  $region37: #{v_critic_forward.1} parent=0 // pred_fallthru
    _

</llo_original>
